<compile_context>
chip_gen: v6e
topology: v6e:2x2x1
jax: 0.10.0
libtpu: 0.0.40
codegen_flags: <defaults>
</compile_context>

<pallas_src>
import jax
import jax.numpy as jnp
from jax.experimental import pallas as pl
from jax.experimental.pallas import tpu as pltpu

H_EPS = 1e-5
DERIVATIVE_ORDER = 0.5           # order 0.5 -> x**0.5 == sqrt(x) for the non-negative diff
INV_H = float(1.0 / H_EPS)       # compile-time constant multiply (avoids a per-element divide)

LANES = 512                      # large multiple of 128 -> unmasked lane-dense stores
ROW_BLOCK = 1024                 # 1024 x 512 f32 = 2 MiB per block buffer
PAD_MULT = 16 * LANES            # rows stay a multiple of 16 -> valid sublanes for f32/bf16/fp16


def _frac_act_kernel(x_ref, o_ref):
    x = x_ref[...].astype(jnp.float32)      # in-register upcast; free under memory slack
    base = jnp.maximum(x, 0.0)              # relu(x)
    base_ph = jnp.maximum(x + H_EPS, 0.0)   # relu(x + h)
    diff = (base_ph - base) * INV_H         # finite difference / h  (diff >= 0)
    fd = jnp.sqrt(diff)                     # (.) ** 0.5  (EUP, single op)
    o_ref[...] = (base + fd).astype(o_ref.dtype)


def fractional_activation(x):
    """Applies FractionalActivation elementwise. Accepts any float shape; returns same shape/dtype."""
    orig_shape = x.shape
    dtype = x.dtype
    n = x.size

    xf = x.reshape(-1)                      # contiguous flatten: no HBM copy
    padded = pl.cdiv(n, PAD_MULT) * PAD_MULT
    needs_pad = padded != n
    if needs_pad:
        # Fallback for sizes not a multiple of 8192 elements (one extra HBM copy each way).
        xf = jnp.pad(xf, (0, padded - n))
    rows = padded // LANES
    x2d = xf.reshape(rows, LANES)           # lane-dense 2-D slab

    block_rows = min(ROW_BLOCK, rows)       # rows is a multiple of 16, so block_rows is too
    grid = (pl.cdiv(rows, block_rows),)     # ragged last block is masked by Pallas

    out2d = pl.pallas_call(
        _frac_act_kernel,
        out_shape=jax.ShapeDtypeStruct((rows, LANES), dtype),
        grid_spec=pltpu.PrefetchScalarGridSpec(
            num_scalar_prefetch=0,
            grid=grid,
            in_specs=[pl.BlockSpec((block_rows, LANES), lambda i: (i, 0))],
            out_specs=pl.BlockSpec((block_rows, LANES), lambda i: (i, 0)),
        ),
        compiler_params=pltpu.CompilerParams(
            dimension_semantics=("parallel",),   # megacore sharding on v7x
        ),
    )(x2d)

    out = out2d.reshape(-1)
    if needs_pad:
        out = out[:n]
    return out.reshape(orig_shape)


def _reference(x):
    xf = x.astype(jnp.float32)
    base = jnp.maximum(xf, 0.0)
    base_ph = jnp.maximum(xf + H_EPS, 0.0)
    fd = ((base_ph - base) / H_EPS) ** DERIVATIVE_ORDER
    return (base + fd).astype(x.dtype)


if __name__ == "__main__":
    key = jax.random.PRNGKey(0)
    # Small NCHW-like input consistent with a conv-activation usage.
    x = jax.random.normal(key, (2, 4, 16, 16), dtype=jnp.float32)

    out = fractional_activation(x)
    out = jax.block_until_ready(out)

    ref = _reference(x)
    assert out.shape == x.shape and out.dtype == x.dtype
    assert jnp.allclose(out.astype(jnp.float32), ref.astype(jnp.float32),
                        atol=1e-5, rtol=1e-5), "mismatch vs reference"

    print("KERNEL_OK")
</pallas_src>

<mosaic_0001>
module attributes {stable_mosaic.version = 11 : i64} {
  func.func @_frac_act_kernel(%arg0: i32, %arg1: memref<16x512xf32, #tpu.memory_space<vmem>>, %arg2: memref<16x512xf32, #tpu.memory_space<vmem>>) attributes {dimension_semantics = [#tpu.dimension_semantics<parallel>], iteration_bounds = array<i64: 1>, scalar_prefetch = 0 : i64, scratch_operands = 0 : i64, tpu.core_type = #tpu.core_type<tc>, window_params = [{transform_indices = @transform_0, window_bounds = array<i64: 16, 512>}, {transform_indices = @transform_1, window_bounds = array<i64: 16, 512>}]} {
    %c0 = arith.constant 0 : index
    %c0_0 = arith.constant 0 : index
    %0 = vector.load %arg1[%c0, %c0_0] : memref<16x512xf32, #tpu.memory_space<vmem>>, vector<16x512xf32>
    %cst = arith.constant 0.000000e+00 : f32
    %1 = vector.broadcast %cst : f32 to vector<16x512xf32>
    %2 = arith.maximumf %0, %1 : vector<16x512xf32>
    %cst_1 = arith.constant 9.99999974E-6 : f32
    %3 = vector.broadcast %cst_1 : f32 to vector<16x512xf32>
    %4 = arith.addf %0, %3 : vector<16x512xf32>
    %cst_2 = arith.constant 0.000000e+00 : f32
    %5 = vector.broadcast %cst_2 : f32 to vector<16x512xf32>
    %6 = arith.maximumf %4, %5 : vector<16x512xf32>
    %7 = arith.subf %6, %2 : vector<16x512xf32>
    %cst_3 = arith.constant 1.000000e+05 : f32
    %8 = vector.broadcast %cst_3 : f32 to vector<16x512xf32>
    %9 = arith.mulf %7, %8 : vector<16x512xf32>
    %10 = math.sqrt %9 : vector<16x512xf32>
    %11 = arith.addf %2, %10 : vector<16x512xf32>
    %c0_4 = arith.constant 0 : index
    %c0_5 = arith.constant 0 : index
    %12 = vector.load %arg2[%c0_4, %c0_5] : memref<16x512xf32, #tpu.memory_space<vmem>>, vector<16x512xf32>
    tpu.vector_store %arg2[%c0_4, %c0_5], %11 {strides = array<i32>} : memref<16x512xf32, #tpu.memory_space<vmem>>, vector<16x512xf32>,
    return
  }
  func.func @transform_0(%arg0: i32) -> (i32, i32) {
    %c0_i32 = arith.constant 0 : i32
    %c0_i32_0 = arith.constant 0 : i32
    return %arg0, %c0_i32 : i32, i32
  }
  func.func @transform_1(%arg0: i32) -> (i32, i32) {
    %c0_i32 = arith.constant 0 : i32
    %c0_i32_0 = arith.constant 0 : i32
    return %arg0, %c0_i32 : i32, i32
  }
}

</mosaic_0001>

<llo_original>
// kernel: tpu_custom_call.1
$region0: #{tpu_custom_call.1}
  #allocation0 [shape = 'u32[]', space=smem, size = 0x4, offset = 0x4, fixed_abs, tag = 'smem constant byte address 0x4 - core index']
  #allocation1 [shape = 'u32[144,128]{1,0:T(1,128)}', space=vmem, size = 0x12000, scoped, tag = 'internal scratch']
  %s0 = inlined_call_operand.hbm [shape: f32[16,512], index: 0, kind: input, shape index: {}]
  %s1 = inlined_call_operand.hbm [shape: f32[16,512], index: 1, kind: output, shape index: {}]
  %s2 = sld [smem:[#allocation0]]
  $region18: #{tpu_custom_call.1} parent=0
    _
  %s4 = ssub.s32 1, %s2
  %s5 = scalar_select 0, %s4, %s2
  $region1: #{tpu_custom_call.1} parent=0
    #allocation2 [shape = 'u8[32768]{0}', space=vmem, size = 0x8000, scoped, tag = 'input window, operand 0, single buffered']
    #allocation3 [shape = 's32[1]{0}', space=sflag, size = 0x4, scoped, tag = 'scoped memory for tpu_custom_call.1']
    #allocation4 [shape = 's32[1]{0}', space=sflag, size = 0x4, scoped, tag = 'scoped memory for tpu_custom_call.1']
    #allocation5 [shape = 'u8[32768]{0}', space=vmem, size = 0x8000, scoped, tag = 'output window, operand 0, single buffered']
    %6 = vsyncpa [#allocation3], 0
    %7 = vsyncpa [#allocation4], 0
    // Predicated region
    $region2: #{tpu_custom_call.1} parent=1 // pred_check
      _
    $region3: #{tpu_custom_call.1} parent=1 // pred_check_branch
      %9 = sbr.rel (0) target = $region5
    $region4: #{tpu_custom_call.1} parent=1 // pred_region
      %s11 = ssub.s32 1024, 1024
      %12 = vsyncadd [#allocation3], %s11
      %s13 = sshll.u32 [#allocation2], 4
      %s14 = int_to_ptr.vmem [resolvable:$true] %s13
      %19 = dma.hbm_to_vmem [thread:$0]  %s0, 1024, %s14, [#allocation3], 512, 512, 32
    $region5: #{tpu_custom_call.1} parent=1 // pred_fallthru
      _
    // Predicated region
    $region6: #{tpu_custom_call.1} parent=1 // pred_check
      _
    $region7: #{tpu_custom_call.1} parent=1 // pred_check_branch
      %21 = sbr.rel (0) target = $region9
    $region8: #{tpu_custom_call.1} parent=1 // pred_region
      %22 = dma.done [#allocation3], 1024
    $region9: #{tpu_custom_call.1} parent=1 // pred_fallthru
      _
    %v23 = vld [vmem:[#allocation2] sm:$0xff]
    %v24 = vld [vmem:[#allocation2 + $0x8] sm:$0xff]
    %v25 = vld [vmem:[#allocation2 + $0x10] sm:$0xff]
    %v26 = vld [vmem:[#allocation2 + $0x18] sm:$0xff]
    %v27 = vld [vmem:[#allocation2 + $0x20] sm:$0xff]
    %v28 = vld [vmem:[#allocation2 + $0x28] sm:$0xff]
    %v29 = vld [vmem:[#allocation2 + $0x30] sm:$0xff]
    %v30 = vld [vmem:[#allocation2 + $0x38] sm:$0xff]
    %v31 = vmax.f32 %v23, 0.0
    %v32 = vmax.f32 %v24, 0.0
    %v33 = vmax.f32 %v25, 0.0
    %v34 = vmax.f32 %v26, 0.0
    %v35 = vmax.f32 %v27, 0.0
    %v36 = vmax.f32 %v28, 0.0
    %v37 = vmax.f32 %v29, 0.0
    %v38 = vmax.f32 %v30, 0.0
    %v39 = vadd.f32 %v23, 1e-05
    %v40 = vadd.f32 %v24, 1e-05
    %v41 = vadd.f32 %v25, 1e-05
    %v42 = vadd.f32 %v26, 1e-05
    %v43 = vadd.f32 %v27, 1e-05
    %v44 = vadd.f32 %v28, 1e-05
    %v45 = vadd.f32 %v29, 1e-05
    %v46 = vadd.f32 %v30, 1e-05
    %v47 = vmax.f32 %v39, 0.0
    %v48 = vmax.f32 %v40, 0.0
    %v49 = vmax.f32 %v41, 0.0
    %v50 = vmax.f32 %v42, 0.0
    %v51 = vmax.f32 %v43, 0.0
    %v52 = vmax.f32 %v44, 0.0
    %v53 = vmax.f32 %v45, 0.0
    %v54 = vmax.f32 %v46, 0.0
    %v55 = vsub.f32 %v47, %v31
    %v56 = vsub.f32 %v48, %v32
    %v57 = vsub.f32 %v49, %v33
    %v58 = vsub.f32 %v50, %v34
    %v59 = vsub.f32 %v51, %v35
    %v60 = vsub.f32 %v52, %v36
    %v61 = vsub.f32 %v53, %v37
    %v62 = vsub.f32 %v54, %v38
    %v63 = vmul.f32 %v55, 100000.0
    %v64 = vmul.f32 %v56, 100000.0
    %v65 = vmul.f32 %v57, 100000.0
    %v66 = vmul.f32 %v58, 100000.0
    %v67 = vmul.f32 %v59, 100000.0
    %v68 = vmul.f32 %v60, 100000.0
    %v69 = vmul.f32 %v61, 100000.0
    %v70 = vmul.f32 %v62, 100000.0
    %v71 = vrsqrt.pop %v63
    %v72 = vmul.f32 %v63, %v71
    %vm73 = vcmp.eq.f32.partialorder %v63, inf
    %v74 = vsel %vm73, %v63, %v72
    %vm75 = vcmp.eq.f32.partialorder %v63, 0.0
    %v76 = vand.u32 %v63, 2147483648
    %v77 = vsel %vm75, %v76, %v74
    %v78 = vrsqrt.pop %v64
    %v79 = vmul.f32 %v64, %v78
    %vm80 = vcmp.eq.f32.partialorder %v64, inf
    %v81 = vsel %vm80, %v64, %v79
    %vm82 = vcmp.eq.f32.partialorder %v64, 0.0
    %v83 = vand.u32 %v64, 2147483648
    %v84 = vsel %vm82, %v83, %v81
    %v85 = vrsqrt.pop %v65
    %v86 = vmul.f32 %v65, %v85
    %vm87 = vcmp.eq.f32.partialorder %v65, inf
    %v88 = vsel %vm87, %v65, %v86
    %vm89 = vcmp.eq.f32.partialorder %v65, 0.0
    %v90 = vand.u32 %v65, 2147483648
    %v91 = vsel %vm89, %v90, %v88
    %v92 = vrsqrt.pop %v66
    %v93 = vmul.f32 %v66, %v92
    %vm94 = vcmp.eq.f32.partialorder %v66, inf
    %v95 = vsel %vm94, %v66, %v93
    %vm96 = vcmp.eq.f32.partialorder %v66, 0.0
    %v97 = vand.u32 %v66, 2147483648
    %v98 = vsel %vm96, %v97, %v95
    %v99 = vrsqrt.pop %v67
    %v100 = vmul.f32 %v67, %v99
    %vm101 = vcmp.eq.f32.partialorder %v67, inf
    %v102 = vsel %vm101, %v67, %v100
    %vm103 = vcmp.eq.f32.partialorder %v67, 0.0
    %v104 = vand.u32 %v67, 2147483648
    %v105 = vsel %vm103, %v104, %v102
    %v106 = vrsqrt.pop %v68
    %v107 = vmul.f32 %v68, %v106
    %vm108 = vcmp.eq.f32.partialorder %v68, inf
    %v109 = vsel %vm108, %v68, %v107
    %vm110 = vcmp.eq.f32.partialorder %v68, 0.0
    %v111 = vand.u32 %v68, 2147483648
    %v112 = vsel %vm110, %v111, %v109
    %v113 = vrsqrt.pop %v69
    %v114 = vmul.f32 %v69, %v113
    %vm115 = vcmp.eq.f32.partialorder %v69, inf
    %v116 = vsel %vm115, %v69, %v114
    %vm117 = vcmp.eq.f32.partialorder %v69, 0.0
    %v118 = vand.u32 %v69, 2147483648
    %v119 = vsel %vm117, %v118, %v116
    %v120 = vrsqrt.pop %v70
    %v121 = vmul.f32 %v70, %v120
    %vm122 = vcmp.eq.f32.partialorder %v70, inf
    %v123 = vsel %vm122, %v70, %v121
    %vm124 = vcmp.eq.f32.partialorder %v70, 0.0
    %v125 = vand.u32 %v70, 2147483648
    %v126 = vsel %vm124, %v125, %v123
    %v127 = vadd.f32 %v31, %v77
    %v128 = vadd.f32 %v32, %v84
    %v129 = vadd.f32 %v33, %v91
    %v130 = vadd.f32 %v34, %v98
    %v131 = vadd.f32 %v35, %v105
    %v132 = vadd.f32 %v36, %v112
    %v133 = vadd.f32 %v37, %v119
    %v134 = vadd.f32 %v38, %v126
    %135 = vst [vmem:[#allocation5] sm:$0xff] %v127
    %136 = vst [vmem:[#allocation5 + $0x8] sm:$0xff] %v128
    %137 = vst [vmem:[#allocation5 + $0x10] sm:$0xff] %v129
    %138 = vst [vmem:[#allocation5 + $0x18] sm:$0xff] %v130
    %139 = vst [vmem:[#allocation5 + $0x20] sm:$0xff] %v131
    %140 = vst [vmem:[#allocation5 + $0x28] sm:$0xff] %v132
    %141 = vst [vmem:[#allocation5 + $0x30] sm:$0xff] %v133
    %142 = vst [vmem:[#allocation5 + $0x38] sm:$0xff] %v134
    // Predicated region
    $region10: #{tpu_custom_call.1} parent=1 // pred_check
      _
    $region11: #{tpu_custom_call.1} parent=1 // pred_check_branch
      %144 = sbr.rel (0) target = $region13
    $region12: #{tpu_custom_call.1} parent=1 // pred_region
      %s146 = ssub.s32 1024, 1024
      %147 = vsyncadd [#allocation4], %s146
      %s148 = sshll.u32 [#allocation5], 4
      %s149 = int_to_ptr.vmem [resolvable:$true] %s148
      %154 = dma.vmem_to_hbm [thread:$0]  %s149, 1024, %s1, [#allocation4], 512, 512, 32
    $region13: #{tpu_custom_call.1} parent=1 // pred_fallthru
      _
    // Predicated region
    $region14: #{tpu_custom_call.1} parent=1 // pred_check
      _
    $region15: #{tpu_custom_call.1} parent=1 // pred_check_branch
      %156 = sbr.rel (0) target = $region17
    $region16: #{tpu_custom_call.1} parent=1 // pred_region
      %157 = dma.done [#allocation4], 1024
    $region17: #{tpu_custom_call.1} parent=1 // pred_fallthru
      _
    %158 = vsyncpa [#allocation3], 1
    %159 = vsyncpa [#allocation4], 1

</llo_original>
